<compile_context>
chip_gen: v7x
topology: tpu7x:2x2x1
jax: 0.10.0
libtpu: 0.0.40
codegen_flags: <defaults>
</compile_context>

<pallas_src>
import functools

import jax
import jax.numpy as jnp
from jax import lax
from jax.experimental import pallas as pl
from jax.experimental.pallas import tpu as pltpu


def _round_up(x, m):
    return ((x + m - 1) // m) * m


# ----------------------------------------------------------------------------
# Pallas kernels: tiled matmul (bf16 inputs, f32 accumulate) + BN scale/shift
# + ReLU, bf16 output.
# ----------------------------------------------------------------------------
def _kernel_single_k(p_ref, w_ref, scale_ref, shift_ref, o_ref):
    # Whole reduction fits one K tile: no scratch accumulator needed.
    acc = jnp.dot(p_ref[...], w_ref[...], preferred_element_type=jnp.float32)
    y = acc * scale_ref[...] + shift_ref[...]
    o_ref[...] = jnp.maximum(y, 0.0).astype(o_ref.dtype)


def _kernel_multi_k(p_ref, w_ref, scale_ref, shift_ref, o_ref, acc_ref):
    k = pl.program_id(2)

    @pl.when(k == 0)
    def _():
        acc_ref[...] = jnp.zeros_like(acc_ref)

    acc_ref[...] += jnp.dot(p_ref[...], w_ref[...],
                            preferred_element_type=jnp.float32)

    @pl.when(k == pl.num_programs(2) - 1)
    def _():
        y = acc_ref[...] * scale_ref[...] + shift_ref[...]
        o_ref[...] = jnp.maximum(y, 0.0).astype(o_ref.dtype)


def _fused_matmul_bn_relu(patches, w_mat, scale, shift, *, tm, tn, tk):
    M, K = patches.shape
    _, OC = w_mat.shape
    assert M % tm == 0 and K % tk == 0 and OC % tn == 0, (M, K, OC, tm, tn, tk)
    nk = K // tk

    cost = pl.CostEstimate(
        flops=2 * M * K * OC,
        transcendentals=0,
        bytes_accessed=(patches.size * patches.dtype.itemsize
                        + w_mat.size * w_mat.dtype.itemsize
                        + (scale.size + shift.size) * 4
                        + M * OC * 2),        # bf16 output
    )
    out_shape = jax.ShapeDtypeStruct((M, OC), jnp.bfloat16)

    if nk == 1:
        grid_spec = pltpu.PrefetchScalarGridSpec(
            num_scalar_prefetch=0,
            grid=(M // tm, OC // tn),
            in_specs=[
                pl.BlockSpec((tm, tk), lambda i, j: (i, 0)),
                pl.BlockSpec((tk, tn), lambda i, j: (0, j)),
                pl.BlockSpec((1, tn), lambda i, j: (0, j)),
                pl.BlockSpec((1, tn), lambda i, j: (0, j)),
            ],
            out_specs=pl.BlockSpec((tm, tn), lambda i, j: (i, j)),
        )
        kernel = _kernel_single_k
        semantics = ("parallel", "parallel")
    else:
        grid_spec = pltpu.PrefetchScalarGridSpec(
            num_scalar_prefetch=0,
            grid=(M // tm, OC // tn, nk),
            in_specs=[
                pl.BlockSpec((tm, tk), lambda i, j, k: (i, k)),
                pl.BlockSpec((tk, tn), lambda i, j, k: (k, j)),
                pl.BlockSpec((1, tn), lambda i, j, k: (0, j)),
                pl.BlockSpec((1, tn), lambda i, j, k: (0, j)),
            ],
            out_specs=pl.BlockSpec((tm, tn), lambda i, j, k: (i, j)),
            scratch_shapes=[pltpu.VMEM((tm, tn), jnp.float32)],
        )
        kernel = _kernel_multi_k
        semantics = ("parallel", "parallel", "arbitrary")

    return pl.pallas_call(
        kernel,
        out_shape=out_shape,
        grid_spec=grid_spec,
        compiler_params=pltpu.CompilerParams(
            dimension_semantics=semantics,
            vmem_limit_bytes=32 * 1024 * 1024,
        ),
        cost_estimate=cost,
    )(patches, w_mat, scale, shift)


# ----------------------------------------------------------------------------
# im2col on an NHWC input: taps concatenated along the trailing axis so the
# duplicated data is never transposed afterwards; K zero-padding folded in.
# Feature order is (kh, kw, c).
# ----------------------------------------------------------------------------
def _im2col_nhwc(x_nhwc, kh, kw, stride, padding, dilation, k_extra):
    N, H, W, C = x_nhwc.shape
    xp = jnp.pad(x_nhwc,
                 ((0, 0), (padding, padding), (padding, padding), (0, 0)))
    OH = (H + 2 * padding - dilation * (kh - 1) - 1) // stride + 1
    OW = (W + 2 * padding - dilation * (kw - 1) - 1) // stride + 1
    cols = []
    for i in range(kh):
        for j in range(kw):
            cols.append(xp[:,
                           i * dilation: i * dilation + stride * OH: stride,
                           j * dilation: j * dilation + stride * OW: stride,
                           :])                      # (N, OH, OW, C)
    if k_extra:
        cols.append(jnp.zeros((N, OH, OW, k_extra), dtype=x_nhwc.dtype))
    col = jnp.concatenate(cols, axis=-1)            # (N, OH, OW, KH*KW*C + pad)
    return col.reshape(N * OH * OW, -1), OH, OW


def _pick_tm(M, target=512):
    """Largest multiple-of-8 divisor of M that is <= target (0 if none)."""
    cap = min(M, target)
    cap -= cap % 8
    for tm in range(cap, 0, -8):
        if M % tm == 0:
            return tm
    return 0


# ----------------------------------------------------------------------------
# BN_Conv2d forward: Conv2d(bias=True) -> BatchNorm2d (eval) -> ReLU
# ----------------------------------------------------------------------------
@functools.partial(jax.jit, static_argnames=("stride", "padding", "dilation",
                                             "data_format_out"))
def bn_conv2d_forward(x, weight, conv_bias, gamma, beta, run_mean, run_var,
                      *, stride, padding, dilation, eps=1e-5,
                      data_format_out="NCHW"):
    OC, IC, KH, KW = weight.shape
    N = x.shape[0]
    K = IC * KH * KW

    # --- reduction (K) axis tiling -------------------------------------------
    if K <= 1024:
        K_pad = _round_up(K, 128) if K >= 256 else _round_up(K, 16)
        tk = K_pad
    else:
        tk = 512
        K_pad = _round_up(K, tk)

    # --- OC axis: lane-dense 128 tiles when large, true OC when small --------
    if OC >= 128:
        OC_pad = _round_up(OC, 128)
        tn = 128
    else:
        OC_pad = OC          # full-dim block; masked stores but ~16x fewer bytes
        tn = OC

    # --- im2col (interim cheap fix, see header) -------------------------------
    x_nhwc = x.astype(jnp.bfloat16).transpose(0, 2, 3, 1)
    patches, OH, OW = _im2col_nhwc(x_nhwc, KH, KW, stride, padding, dilation,
                                   K_pad - K)
    M = N * OH * OW

    # --- M axis: prefer a tile dividing M exactly (no pad copy) ---------------
    tm = _pick_tm(M, target=512)
    if tm == 0:
        tm = min(_round_up(M, 8), 512)
        M_pad = _round_up(M, tm)
        patches = jnp.pad(patches, ((0, M_pad - M), (0, 0)))   # fallback only
    else:
        M_pad = M
    # Make sure v7x's two TensorCores / megacore both get a parallel block.
    if (M_pad // tm) * (OC_pad // tn) < 2:
        half = (tm // 2) - ((tm // 2) % 8)
        if half >= 8 and M_pad % half == 0:
            tm = half

    # --- BN folded into per-channel f32 scale/shift (applied in epilogue) -----
    #   y = (conv(x) + b - mean) * gamma / sqrt(var+eps) + beta
    #     = conv(x) * scale + ((b - mean) * scale + beta)
    scale = gamma / jnp.sqrt(run_var + eps)                      # (OC,)
    shift = (conv_bias - run_mean) * scale + beta                # (OC,)
    # Weight reordered to (kh, kw, c) x OC to match the patch feature order.
    w_mat = weight.transpose(2, 3, 1, 0).reshape(K, OC)
    w_p = jnp.pad(w_mat, ((0, K_pad - K), (0, OC_pad - OC))).astype(jnp.bfloat16)
    scale_p = jnp.pad(scale, (0, OC_pad - OC)).reshape(1, OC_pad)
    scale_p = scale_p.astype(jnp.float32)
    shift_p = jnp.pad(shift, (0, OC_pad - OC)).reshape(1, OC_pad)
    shift_p = shift_p.astype(jnp.float32)

    out_flat = _fused_matmul_bn_relu(patches, w_p, scale_p, shift_p,
                                     tm=tm, tn=tn, tk=tk)   # (M_pad, OC_pad) bf16

    out = out_flat[:M, :OC].reshape(N, OH, OW, OC)          # NHWC, bf16
    if data_format_out == "NCHW":                           # default: PyTorch layout
        out = out.transpose(0, 3, 1, 2)
    return out


# ----------------------------------------------------------------------------
# Pure-JAX reference for correctness check
# ----------------------------------------------------------------------------
def _reference(x, weight, conv_bias, gamma, beta, run_mean, run_var,
               *, stride, padding, dilation, eps=1e-5):
    z = lax.conv_general_dilated(
        x, weight, window_strides=(stride, stride),
        padding=[(padding, padding), (padding, padding)],
        rhs_dilation=(dilation, dilation),
        dimension_numbers=("NCHW", "OIHW", "NCHW"))
    z = z + conv_bias[None, :, None, None]
    z = (z - run_mean[None, :, None, None]) / jnp.sqrt(
        run_var[None, :, None, None] + eps)
    z = z * gamma[None, :, None, None] + beta[None, :, None, None]
    return jnp.maximum(z, 0.0)


if __name__ == "__main__":
    # Small, PyTorch-consistent shapes:
    # BN_Conv2d(in_channels=4, out_channels=8, kernel_size=3, stride=1,
    #           padding=1, dilation=1, groups=1, bias=True)
    N, IC, H, W = 2, 4, 16, 16
    OC, KH, KW = 8, 3, 3
    stride, padding, dilation = 1, 1, 1

    key = jax.random.PRNGKey(0)
    kx, kw_, kb, kg, kbt, km, kv = jax.random.split(key, 7)

    x = jax.random.normal(kx, (N, IC, H, W), dtype=jnp.float32)
    weight = jax.random.normal(kw_, (OC, IC, KH, KW), dtype=jnp.float32) * 0.1
    conv_bias = jax.random.normal(kb, (OC,), dtype=jnp.float32) * 0.1
    gamma = 1.0 + 0.1 * jax.random.normal(kg, (OC,), dtype=jnp.float32)
    beta = 0.1 * jax.random.normal(kbt, (OC,), dtype=jnp.float32)
    run_mean = 0.1 * jax.random.normal(km, (OC,), dtype=jnp.float32)
    run_var = 0.5 + jnp.abs(jax.random.normal(kv, (OC,), dtype=jnp.float32))

    out = bn_conv2d_forward(x, weight, conv_bias, gamma, beta, run_mean,
                            run_var, stride=stride, padding=padding,
                            dilation=dilation)
    jax.block_until_ready(out)

    ref = _reference(x, weight, conv_bias, gamma, beta, run_mean, run_var,
                     stride=stride, padding=padding, dilation=dilation)
    assert out.shape == (N, OC, H, W), out.shape
    # bf16 MXU inputs + bf16 output => relaxed tolerance vs the f32 reference.
    assert jnp.allclose(out.astype(jnp.float32), ref, atol=5e-2, rtol=5e-2), \
        float(jnp.max(jnp.abs(out.astype(jnp.float32) - ref)))

    print("KERNEL_OK")
</pallas_src>

<mosaic_0001>
module attributes {stable_mosaic.version = 11 : i64} {
  func.func @_kernel_single_k(%arg0: i32, %arg1: i32, %arg2: memref<256x48xbf16, #tpu.memory_space<vmem>>, %arg3: memref<48x8xbf16, #tpu.memory_space<vmem>>, %arg4: memref<1x8xf32, #tpu.memory_space<vmem>>, %arg5: memref<1x8xf32, #tpu.memory_space<vmem>>, %arg6: memref<256x8xbf16, #tpu.memory_space<vmem>>) attributes {dimension_semantics = [#tpu.dimension_semantics<parallel>, #tpu.dimension_semantics<parallel>], iteration_bounds = array<i64: 2, 1>, scalar_prefetch = 0 : i64, scratch_operands = 0 : i64, tpu.core_type = #tpu.core_type<tc>, window_params = [{transform_indices = @transform_0, window_bounds = array<i64: 256, 48>}, {transform_indices = @transform_1, window_bounds = array<i64: 48, 8>}, {transform_indices = @transform_2, window_bounds = array<i64: 1, 8>}, {transform_indices = @transform_3, window_bounds = array<i64: 1, 8>}, {transform_indices = @transform_4, window_bounds = array<i64: 256, 8>}]} {
    %c0 = arith.constant 0 : index
    %c0_0 = arith.constant 0 : index
    %0 = vector.load %arg2[%c0, %c0_0] : memref<256x48xbf16, #tpu.memory_space<vmem>>, vector<256x48xbf16>
    %c0_1 = arith.constant 0 : index
    %c0_2 = arith.constant 0 : index
    %1 = vector.load %arg3[%c0_1, %c0_2] : memref<48x8xbf16, #tpu.memory_space<vmem>>, vector<48x8xbf16>
    %cst = arith.constant dense<0.000000e+00> : vector<256x8xf32>
    %2 = tpu.matmul %0, %1, %cst {dimension_numbers = #tpu.dot_dimension_numbers<[1], [0], [0], [1], [0, 0, 1, 1], [], []>} : vector<256x48xbf16>, vector<48x8xbf16>, vector<256x8xf32> -> vector<256x8xf32>
    %c0_3 = arith.constant 0 : index
    %c0_4 = arith.constant 0 : index
    %3 = vector.load %arg4[%c0_3, %c0_4] : memref<1x8xf32, #tpu.memory_space<vmem>>, vector<1x8xf32>
    %4 = vector.broadcast %3 : vector<1x8xf32> to vector<256x8xf32>
    %5 = arith.mulf %2, %4 : vector<256x8xf32>
    %c0_5 = arith.constant 0 : index
    %c0_6 = arith.constant 0 : index
    %6 = vector.load %arg5[%c0_5, %c0_6] : memref<1x8xf32, #tpu.memory_space<vmem>>, vector<1x8xf32>
    %7 = vector.broadcast %6 : vector<1x8xf32> to vector<256x8xf32>
    %8 = arith.addf %5, %7 : vector<256x8xf32>
    %cst_7 = arith.constant 0.000000e+00 : f32
    %9 = vector.broadcast %cst_7 : f32 to vector<256x8xf32>
    %10 = arith.maximumf %8, %9 : vector<256x8xf32>
    %11 = arith.truncf %10 : vector<256x8xf32> to vector<256x8xbf16>
    %c0_8 = arith.constant 0 : index
    %c0_9 = arith.constant 0 : index
    %12 = vector.load %arg6[%c0_8, %c0_9] : memref<256x8xbf16, #tpu.memory_space<vmem>>, vector<256x8xbf16>
    tpu.vector_store %arg6[%c0_8, %c0_9], %11 {strides = array<i32>} : memref<256x8xbf16, #tpu.memory_space<vmem>>, vector<256x8xbf16>,
    return
  }
  func.func @transform_0(%arg0: i32, %arg1: i32) -> (i32, i32) {
    %c0_i32 = arith.constant 0 : i32
    %c0_i32_0 = arith.constant 0 : i32
    return %arg0, %c0_i32 : i32, i32
  }
  func.func @transform_1(%arg0: i32, %arg1: i32) -> (i32, i32) {
    %c0_i32 = arith.constant 0 : i32
    %c0_i32_0 = arith.constant 0 : i32
    return %c0_i32, %arg1 : i32, i32
  }
  func.func @transform_2(%arg0: i32, %arg1: i32) -> (i32, i32) {
    %c0_i32 = arith.constant 0 : i32
    %c0_i32_0 = arith.constant 0 : i32
    return %c0_i32, %arg1 : i32, i32
  }
  func.func @transform_3(%arg0: i32, %arg1: i32) -> (i32, i32) {
    %c0_i32 = arith.constant 0 : i32
    %c0_i32_0 = arith.constant 0 : i32
    return %c0_i32, %arg1 : i32, i32
  }
  func.func @transform_4(%arg0: i32, %arg1: i32) -> (i32, i32) {
    %c0_i32 = arith.constant 0 : i32
    return %arg0, %arg1 : i32, i32
  }
}

</mosaic_0001>

<llo_original>
// kernel: bn_conv2d_forward.1
$region0: #{bn_conv2d_forward.1}
  #allocation0 [shape = 'u32[]', space=smem, size = 0x4, offset = 0x4, fixed_abs, tag = 'smem constant byte address 0x4 - core index']
  #allocation1 [shape = 'u32[144,128]{1,0:T(1,128)}', space=vmem, size = 0x12000, scoped, tag = 'internal scratch']
  %s0 = inlined_call_operand.vmem [shape: bf16[512,48], index: 0, kind: input, shape index: {}]
  %s1 = inlined_call_operand.vmem [shape: bf16[48,8], index: 1, kind: input, shape index: {}]
  %s2 = inlined_call_operand.vmem [shape: f32[1,8], index: 2, kind: input, shape index: {}]
  %s3 = inlined_call_operand.vmem [shape: f32[1,8], index: 3, kind: input, shape index: {}]
  %s4 = inlined_call_operand.vmem [shape: bf16[512,8], index: 4, kind: output, shape index: {}]
  %s5 = sld [smem:[#allocation0]]
  $region49: #{bn_conv2d_forward.1} parent=0
    _
  %s7 = ssub.s32 1, %s5
  %s8 = scalar_select 0, %s7, %s5
  loop: start=0, step=1, limit=4
  $region2: #{bn_conv2d_forward.1} parent=0 // loop_pre_header
    _
  $region3: #{bn_conv2d_forward.1} parent=0 // loop_header
    %s10 = sphi 0, %s14
    %p11 = scmp.ge.s32.totalorder %s10, 4
    %s17 = sphi 0, %s29
    %s18 = sphi 0, %s25
    %s19 = sphi 0, %s17
    %s20 = sphi 0, %s18
    %s21 = sphi 0, %s19
    %s22 = sphi 0, %s20
    %s32 = sphi 0, %s34
    %s35 = sphi 0, %s32
    %s36 = sphi 0, %s35
    %s52 = sphi 0, %s36
    %s58 = sphi 0, %s60
    %s61 = sphi 0, %s58
    %s62 = sphi 0, %s61
    %s78 = sphi 0, %s62
    %s84 = sphi 0, %s86
    %s87 = sphi 0, %s84
    %s88 = sphi 0, %s87
    %s104 = sphi 0, %s88
    %s110 = sphi 0, %s112
    %s113 = sphi 0, %s110
    %s114 = sphi 0, %s113
    %s130 = sphi 0, %s114
    %s138 = sphi 0, %s140
    %s141 = sphi 0, %s138
    %s142 = sphi 0, %s141
    %s158 = sphi 0, %s142
  $region4: #{bn_conv2d_forward.1} parent=0 // loop_header_branch
    %13 = sbr.rel (%p11) target = $region8
  $region5: #{bn_conv2d_forward.1} parent=0 // loop_body
    %s15 = ssub.s32 %s10, 1
    %s16 = ssub.s32 %s10, 2
    %s23 = sadd.s32 1, %s18
    %p24 = scmp.ge.s32.totalorder %s23, 1
    %s25 = scalar_select %p24, 0, %s23
    %s26 = sadd.s32 1, %s17
    %s27 = scalar_select %p24, %s26, %s17
    %p28 = scmp.ge.s32.totalorder %s27, 2
    %s29 = scalar_select %p28, 0, %s27
    %s30 = ssub.s32 %s17, %s29
    %p31 = scmp.eq.s32.totalorder %s30, 0
    %s33 = sadd.s32 %s32, 1
    %s34 = scalar_select %p31, %s32, %s33
    %p37 = pneg %p31
    %p38 = scmp.eq.s32.totalorder %s10, 1
    %p39 = por %p37, %p38
    %p40 = scmp.ne.s32.totalorder %s32, %s35
    %p41 = scmp.eq.s32.totalorder %s10, 0
    %p42 = por %p40, %p41
    %p43 = scmp.ne.s32.totalorder %s32, %s35
    %p44 = scmp.eq.s32.totalorder %s15, 1
    %p45 = por %p43, %p44
    %p46 = scmp.ne.s32.totalorder %s35, %s36
    %p47 = scmp.eq.s32.totalorder %s15, 0
    %p48 = por %p46, %p47
    %p49 = scmp.ne.s32.totalorder %s35, %s36
    %p50 = scmp.eq.s32.totalorder %s16, 1
    %p51 = por %p49, %p50
    %p53 = scmp.ne.s32.totalorder %s36, %s52
    %p54 = scmp.eq.s32.totalorder %s16, 0
    %p55 = por %p53, %p54
    %s56 = ssub.s32 %s18, %s25
    %p57 = scmp.eq.s32.totalorder %s56, 0
    %s59 = sadd.s32 %s58, 1
    %s60 = scalar_select %p57, %s58, %s59
    %p63 = pneg %p57
    %p64 = scmp.eq.s32.totalorder %s10, 1
    %p65 = por %p63, %p64
    %p66 = scmp.ne.s32.totalorder %s58, %s61
    %p67 = scmp.eq.s32.totalorder %s10, 0
    %p68 = por %p66, %p67
    %p69 = scmp.ne.s32.totalorder %s58, %s61
    %p70 = scmp.eq.s32.totalorder %s15, 1
    %p71 = por %p69, %p70
    %p72 = scmp.ne.s32.totalorder %s61, %s62
    %p73 = scmp.eq.s32.totalorder %s15, 0
    %p74 = por %p72, %p73
    %p75 = scmp.ne.s32.totalorder %s61, %s62
    %p76 = scmp.eq.s32.totalorder %s16, 1
    %p77 = por %p75, %p76
    %p79 = scmp.ne.s32.totalorder %s62, %s78
    %p80 = scmp.eq.s32.totalorder %s16, 0
    %p81 = por %p79, %p80
    %s82 = ssub.s32 %s18, %s25
    %p83 = scmp.eq.s32.totalorder %s82, 0
    %s85 = sadd.s32 %s84, 1
    %s86 = scalar_select %p83, %s84, %s85
    %p89 = pneg %p83
    %p90 = scmp.eq.s32.totalorder %s10, 1
    %p91 = por %p89, %p90
    %p92 = scmp.ne.s32.totalorder %s84, %s87
    %p93 = scmp.eq.s32.totalorder %s10, 0
    %p94 = por %p92, %p93
    %p95 = scmp.ne.s32.totalorder %s84, %s87
    %p96 = scmp.eq.s32.totalorder %s15, 1
    %p97 = por %p95, %p96
    %p98 = scmp.ne.s32.totalorder %s87, %s88
    %p99 = scmp.eq.s32.totalorder %s15, 0
    %p100 = por %p98, %p99
    %p101 = scmp.ne.s32.totalorder %s87, %s88
    %p102 = scmp.eq.s32.totalorder %s16, 1
    %p103 = por %p101, %p102
    %p105 = scmp.ne.s32.totalorder %s88, %s104
    %p106 = scmp.eq.s32.totalorder %s16, 0
    %p107 = por %p105, %p106
    %s108 = ssub.s32 %s18, %s25
    %p109 = scmp.eq.s32.totalorder %s108, 0
    %s111 = sadd.s32 %s110, 1
    %s112 = scalar_select %p109, %s110, %s111
    %p115 = pneg %p109
    %p116 = scmp.eq.s32.totalorder %s10, 1
    %p117 = por %p115, %p116
    %p118 = scmp.ne.s32.totalorder %s110, %s113
    %p119 = scmp.eq.s32.totalorder %s10, 0
    %p120 = por %p118, %p119
    %p121 = scmp.ne.s32.totalorder %s110, %s113
    %p122 = scmp.eq.s32.totalorder %s15, 1
    %p123 = por %p121, %p122
    %p124 = scmp.ne.s32.totalorder %s113, %s114
    %p125 = scmp.eq.s32.totalorder %s15, 0
    %p126 = por %p124, %p125
    %p127 = scmp.ne.s32.totalorder %s113, %s114
    %p128 = scmp.eq.s32.totalorder %s16, 1
    %p129 = por %p127, %p128
    %p131 = scmp.ne.s32.totalorder %s114, %s130
    %p132 = scmp.eq.s32.totalorder %s16, 0
    %p133 = por %p131, %p132
    %s134 = ssub.s32 %s17, %s29
    %s135 = ssub.s32 %s18, %s25
    %s136 = sor.u32 %s134, %s135
    %p137 = scmp.eq.s32.totalorder %s136, 0
    %s139 = sadd.s32 %s138, 1
    %s140 = scalar_select %p137, %s138, %s139
    %p143 = pneg %p137
    %p144 = scmp.eq.s32.totalorder %s10, 1
    %p145 = por %p143, %p144
    %p146 = scmp.ne.s32.totalorder %s138, %s141
    %p147 = scmp.eq.s32.totalorder %s10, 0
    %p148 = por %p146, %p147
    %p149 = scmp.ne.s32.totalorder %s138, %s141
    %p150 = scmp.eq.s32.totalorder %s15, 1
    %p151 = por %p149, %p150
    %p152 = scmp.ne.s32.totalorder %s141, %s142
    %p153 = scmp.eq.s32.totalorder %s15, 0
    %p154 = por %p152, %p153
    %p155 = scmp.ne.s32.totalorder %s141, %s142
    %p156 = scmp.eq.s32.totalorder %s16, 1
    %p157 = por %p155, %p156
    %p159 = scmp.ne.s32.totalorder %s142, %s158
    %p160 = scmp.eq.s32.totalorder %s16, 0
    %p161 = por %p159, %p160
    %p162 = scmp.le.s32.totalorder 1, %s10
    %p163 = scmp.lt.s32.totalorder %s10, 3
    %p164 = pnand %p162, %p163
    %p165 = pneg %p164
    // Predicated region
    $region9: #{bn_conv2d_forward.1} parent=5 // pred_check
      _
    $region10: #{bn_conv2d_forward.1} parent=5 // pred_check_branch
      %167 = sbr.rel (%p164) target = $region12
    $region11: #{bn_conv2d_forward.1} parent=5 // pred_region
      %s168 = ssub.s32 %s10, 1
      // Predicated region
      $region13: #{bn_conv2d_forward.1} parent=11 // pred_check
        %p169 = pneg %p74
      $region14: #{bn_conv2d_forward.1} parent=11 // pred_check_branch
        %171 = sbr.rel (%p169) target = $region16
      $region15: #{bn_conv2d_forward.1} parent=11 // pred_region
        %p172 = scmp.lt.s32.totalorder %s20, 0
        %s173 = scalar_select %p172, %s20, 0
        %s174 = smul.addr %s173, 4
        %s175 = scalar_lea.vmem %s1, %s174
      $region16: #{bn_conv2d_forward.1} parent=11 // pred_fallthru
        _
      // Predicated region
      $region17: #{bn_conv2d_forward.1} parent=11 // pred_check
        %p176 = pneg %p100
      $region18: #{bn_conv2d_forward.1} parent=11 // pred_check_branch
        %178 = sbr.rel (%p176) target = $region20
      $region19: #{bn_conv2d_forward.1} parent=11 // pred_region
        %p179 = scmp.lt.s32.totalorder %s20, 0
        %s180 = scalar_select %p179, %s20, 0
        %s181 = scalar_lea.vmem %s2, %s180
      $region20: #{bn_conv2d_forward.1} parent=11 // pred_fallthru
        _
      // Predicated region
      $region21: #{bn_conv2d_forward.1} parent=11 // pred_check
        %p182 = pneg %p126
      $region22: #{bn_conv2d_forward.1} parent=11 // pred_check_branch
        %184 = sbr.rel (%p182) target = $region24
      $region23: #{bn_conv2d_forward.1} parent=11 // pred_region
        %p185 = scmp.lt.s32.totalorder %s20, 0
        %s186 = scalar_select %p185, %s20, 0
        %s187 = scalar_lea.vmem %s3, %s186
      $region24: #{bn_conv2d_forward.1} parent=11 // pred_fallthru
        _
    $region12: #{bn_conv2d_forward.1} parent=5 // pred_fallthru
      _
    %p188 = scmp.lt.s32.totalorder %s10, 2
    // Predicated region
    $region25: #{bn_conv2d_forward.1} parent=5 // pred_check
      %p189 = pneg %p188
    $region26: #{bn_conv2d_forward.1} parent=5 // pred_check_branch
      %191 = sbr.rel (%p189) target = $region28
    $region27: #{bn_conv2d_forward.1} parent=5 // pred_region
      // Predicated region
      $region29: #{bn_conv2d_forward.1} parent=27 // pred_check
        %p192 = pneg %p42
      $region30: #{bn_conv2d_forward.1} parent=27 // pred_check_branch
        %194 = sbr.rel (%p192) target = $region32
      $region31: #{bn_conv2d_forward.1} parent=27 // pred_region
        %s195 = smul.u32 32, %s17
        %p196 = scmp.lt.s32.totalorder %s195, 63
        %s197 = scalar_select %p196, %s195, 63
        %s198 = smul.addr %s197, 4
        %s199 = scalar_lea.vmem %s0, %s198
        %s200 = smul.u32 32, %s17
      $region32: #{bn_conv2d_forward.1} parent=27 // pred_fallthru
        _
    $region28: #{bn_conv2d_forward.1} parent=5 // pred_fallthru
      _
    %p201 = scmp.le.s32.totalorder 1, %s10
    %p202 = scmp.lt.s32.totalorder %s10, 3
    %p203 = pnand %p201, %p202
    %p204 = pneg %p203
    // Predicated region
    $region33: #{bn_conv2d_forward.1} parent=5 // pred_check
      _
    $region34: #{bn_conv2d_forward.1} parent=5 // pred_check_branch
      %206 = sbr.rel (%p203) target = $region36
    $region35: #{bn_conv2d_forward.1} parent=5 // pred_region
      %s207 = ssub.s32 %s10, 1
      %s208 = smul.u32 32, %s19
      %p209 = scmp.lt.s32.totalorder %s208, 63
      %s210 = scalar_select %p209, %s208, 63
      %s211 = smul.addr %s210, 4
      %s212 = scalar_lea.vmem %s0, %s211
      %p213 = pneg %p48
      %p214 = pneg %p45
      %p215 = scmp.lt.s32.totalorder %s20, 0
      %s216 = scalar_select %p215, %s20, 0
      %s217 = smul.addr %s216, 4
      %s218 = scalar_lea.vmem %s1, %s217
      %p219 = pneg %p74
      %p220 = pneg %p71
      %p221 = scmp.lt.s32.totalorder %s20, 0
      %s222 = scalar_select %p221, %s20, 0
      %s223 = scalar_lea.vmem %s2, %s222
      %p224 = pneg %p100
      %p225 = pneg %p97
      %p226 = scmp.lt.s32.totalorder %s20, 0
      %s227 = scalar_select %p226, %s20, 0
      %s228 = scalar_lea.vmem %s3, %s227
      %p229 = pneg %p126
      %p230 = pneg %p123
      %p231 = pneg %p154
      %p232 = pneg %p151
      %s233 = smul.u32 32, %s19
      %p234 = scmp.lt.s32.totalorder %s233, 63
      %s235 = scalar_select %p234, %s233, 63
      %p236 = scmp.lt.s32.totalorder %s20, 0
      %s237 = scalar_select %p236, %s20, 0
      %s238 = sadd.s32 %s237, %s235
      %s239 = smul.addr %s238, 4
      %s240 = scalar_lea.vmem %s4, %s239
      %s241 = smul.u32 32, %s19
      %p242 = scmp.lt.s32.totalorder %s241, 63
      %s243 = scalar_select %p242, %s241, 63
      %s244 = smul.addr %s243, 4
      %s245 = scalar_lea.vmem %s0, %s244
      %s246 = smul.u32 32, %s19
      %p247 = scmp.lt.s32.totalorder %s20, 0
      %s248 = scalar_select %p247, %s20, 0
      %s249 = smul.addr %s248, 4
      %s250 = scalar_lea.vmem %s1, %s249
      %p251 = scmp.lt.s32.totalorder %s20, 0
      %s252 = scalar_select %p251, %s20, 0
      %s253 = scalar_lea.vmem %s2, %s252
      %p254 = scmp.lt.s32.totalorder %s20, 0
      %s255 = scalar_select %p254, %s20, 0
      %s256 = scalar_lea.vmem %s3, %s255
      %s257 = smul.u32 32, %s19
      %p258 = scmp.lt.s32.totalorder %s257, 63
      %s259 = scalar_select %p258, %s257, 63
      %p260 = scmp.lt.s32.totalorder %s20, 0
      %s261 = scalar_select %p260, %s20, 0
      %s262 = sadd.s32 %s261, %s259
      %s263 = smul.addr %s262, 4
      %s264 = scalar_lea.vmem %s4, %s263
      %s265 = smul.u32 32, %s19
      %v267 = vld [vmem:[%s245] sm:$0xf]
      %v268 = vld [vmem:[%s245 + $0x4] sm:$0xf]
      %v269 = vld [vmem:[%s245 + $0x8] sm:$0xf]
      %v270 = vld [vmem:[%s245 + $0xc] sm:$0xf]
      %v271 = vld [vmem:[%s245 + $0x10] sm:$0xf]
      %v272 = vld [vmem:[%s245 + $0x14] sm:$0xf]
      %v273 = vld [vmem:[%s245 + $0x18] sm:$0xf]
      %v274 = vld [vmem:[%s245 + $0x1c] sm:$0xf]
      %v275 = vld [vmem:[%s245 + $0x20] sm:$0xf]
      %v276 = vld [vmem:[%s245 + $0x24] sm:$0xf]
      %v277 = vld [vmem:[%s245 + $0x28] sm:$0xf]
      %v278 = vld [vmem:[%s245 + $0x2c] sm:$0xf]
      %v279 = vld [vmem:[%s245 + $0x30] sm:$0xf]
      %v280 = vld [vmem:[%s245 + $0x34] sm:$0xf]
      %v281 = vld [vmem:[%s245 + $0x38] sm:$0xf]
      %v282 = vld [vmem:[%s245 + $0x3c] sm:$0xf]
      %v283 = vld [vmem:[%s245 + $0x40] sm:$0xf]
      %v284 = vld [vmem:[%s245 + $0x44] sm:$0xf]
      %v285 = vld [vmem:[%s245 + $0x48] sm:$0xf]
      %v286 = vld [vmem:[%s245 + $0x4c] sm:$0xf]
      %v287 = vld [vmem:[%s245 + $0x50] sm:$0xf]
      %v288 = vld [vmem:[%s245 + $0x54] sm:$0xf]
      %v289 = vld [vmem:[%s245 + $0x58] sm:$0xf]
      %v290 = vld [vmem:[%s245 + $0x5c] sm:$0xf]
      %v291 = vld [vmem:[%s245 + $0x60] sm:$0xf]
      %v292 = vld [vmem:[%s245 + $0x64] sm:$0xf]
      %v293 = vld [vmem:[%s245 + $0x68] sm:$0xf]
      %v294 = vld [vmem:[%s245 + $0x6c] sm:$0xf]
      %v295 = vld [vmem:[%s245 + $0x70] sm:$0xf]
      %v296 = vld [vmem:[%s245 + $0x74] sm:$0xf]
      %v297 = vld [vmem:[%s245 + $0x78] sm:$0xf]
      %v298 = vld [vmem:[%s245 + $0x7c] sm:$0xf]
      %v299 = vld [vmem:[%s250] sm:$0xf]
      %v300 = vld [vmem:[%s250 + $0x4] sm:$0xf]
      %v301 = vld [vmem:[%s250 + $0x8] sm:$0xf]
      %v302 = vld [vmem:[%s250 + $0xc] sm:$0xf]
      %v303 = vld [vmem:[%s250 + $0x10] sm:$0xf]
      %v304 = vld [vmem:[%s250 + $0x14] sm:$0xf]
      %v337 = vunpack.c.l.b16 %v267
      %v338 = vunpack.c.l.b16 %v268
      %v339 = vunpack.c.l.b16 %v269
      %v340 = vunpack.c.l.b16 %v270
      %v341 = vunpack.c.l.b16 %v271
      %v342 = vunpack.c.l.b16 %v272
      %v343 = vunpack.c.l.b16 %v273
      %v344 = vunpack.c.l.b16 %v274
      %v345 = vunpack.c.l.b16 %v275
      %v346 = vunpack.c.l.b16 %v276
      %v347 = vunpack.c.l.b16 %v277
      %v348 = vunpack.c.l.b16 %v278
      %v349 = vunpack.c.l.b16 %v279
      %v350 = vunpack.c.l.b16 %v280
      %v351 = vunpack.c.l.b16 %v281
      %v352 = vunpack.c.l.b16 %v282
      %v353 = vunpack.c.l.b16 %v283
      %v354 = vunpack.c.l.b16 %v284
      %v355 = vunpack.c.l.b16 %v285
      %v356 = vunpack.c.l.b16 %v286
      %v357 = vunpack.c.l.b16 %v287
      %v358 = vunpack.c.l.b16 %v288
      %v359 = vunpack.c.l.b16 %v289
      %v360 = vunpack.c.l.b16 %v290
      %v361 = vunpack.c.l.b16 %v291
      %v362 = vunpack.c.l.b16 %v292
      %v363 = vunpack.c.l.b16 %v293
      %v364 = vunpack.c.l.b16 %v294
      %v365 = vunpack.c.l.b16 %v295
      %v366 = vunpack.c.l.b16 %v296
      %v367 = vunpack.c.l.b16 %v297
      %v368 = vunpack.c.l.b16 %v298
      %v369 = vpack.c.b16 %v338, %v337
      %v370 = vpack.c.b16 %v340, %v339
      %v371 = vpack.c.b16 %v342, %v341
      %v372 = vpack.c.b16 %v344, %v343
      %v373 = vpack.c.b16 %v346, %v345
      %v374 = vpack.c.b16 %v348, %v347
      %v375 = vpack.c.b16 %v350, %v349
      %v376 = vpack.c.b16 %v352, %v351
      %v377 = vpack.c.b16 %v354, %v353
      %v378 = vpack.c.b16 %v356, %v355
      %v379 = vpack.c.b16 %v358, %v357
      %v380 = vpack.c.b16 %v360, %v359
      %v381 = vpack.c.b16 %v362, %v361
      %v382 = vpack.c.b16 %v364, %v363
      %v383 = vpack.c.b16 %v366, %v365
      %v384 = vpack.c.b16 %v368, %v367
      %v391 = vunpack.c.l.b16 %v299
      %v392 = vunpack.c.l.b16 %v300
      %v393 = vunpack.c.l.b16 %v301
      %v394 = vunpack.c.l.b16 %v302
      %v395 = vunpack.c.l.b16 %v303
      %v396 = vunpack.c.l.b16 %v304
      %v397 = vpack.c.b16 %v392, %v391
      %v398 = vpack.c.b16 %v394, %v393
      %v399 = vpack.c.b16 %v396, %v395
      %vm403 = vcmask 392192
      %v405 = vsel %vm403, %v369, 0
      %v408 = vsel %vm403, %v370, 0
      %v411 = vsel %vm403, %v371, 0
      %v414 = vsel %vm403, %v372, 0
      %v417 = vsel %vm403, %v373, 0
      %v420 = vsel %vm403, %v374, 0
      %v423 = vsel %vm403, %v375, 0
      %v426 = vsel %vm403, %v376, 0
      %v429 = vsel %vm403, %v377, 0
      %v432 = vsel %vm403, %v378, 0
      %v435 = vsel %vm403, %v379, 0
      %v438 = vsel %vm403, %v380, 0
      %v441 = vsel %vm403, %v381, 0
      %v444 = vsel %vm403, %v382, 0
      %v447 = vsel %vm403, %v383, 0
      %v450 = vsel %vm403, %v384, 0
      %452 = vmatprep.subr.bf16.mxu0 0
      %453 = vmatpush1.bf16.msra.mxu0 %v397
      %454 = vmatprep.subr.bf16.mxu0 0
      %455 = vmatpush1.bf16.msra.mxu0 %v398
      %456 = vmatprep.subr.bf16.mxu0 0
      %457 = vmatpush1.bf16.msra.mxu0 %v399
      %458 = vmatprep.subr.bf16.mxu0 0
      %459 = vmatpush1.bf16.msra.mxu0 0
      %460 = vmatprep.subr.bf16.mxu0 0
      %461 = vmatpush1.bf16.msra.mxu0 0
      %462 = vmatprep.subr.bf16.mxu0 0
      %463 = vmatpush1.bf16.msra.mxu0 0
      %464 = vmatprep.subr.bf16.mxu0 0
      %465 = vmatpush1.bf16.msra.mxu0 0
      %466 = vmatprep.subr.bf16.mxu0 0
      %467 = vmatpush1.bf16.msra.mxu0 0
      %468 = vmatprep.subr.bf16.mxu0 0
      %469 = vmatpush1.bf16.msra.mxu0 0
      %470 = vmatprep.subr.bf16.mxu0 0
      %471 = vmatpush1.bf16.msra.mxu0 0
      %472 = vmatprep.subr.bf16.mxu0 0
      %473 = vmatpush1.bf16.msra.mxu0 0
      %474 = vmatprep.subr.bf16.mxu0 0
      %475 = vmatpush1.bf16.msra.mxu0 0
      %476 = vmatprep.subr.bf16.mxu0 0
      %477 = vmatpush1.bf16.msra.mxu0 0
      %478 = vmatprep.subr.bf16.mxu0 0
      %479 = vmatpush1.bf16.msra.mxu0 0
      %480 = vmatprep.subr.bf16.mxu0 0
      %481 = vmatpush1.bf16.msra.mxu0 0
      %482 = vmatprep.subr.bf16.mxu0 0
      %483 = vmatpush1.bf16.msra.mxu0 0
      %484 = vmatprep.mubr.bf16.mxu0 0
      %485 = vmatmul.mubr.bf16.gmra.mrb[0].mxu0 %v405
      %v486 = vpop.f32.mrb[0].mxu0
      %v487 = vadd.f32 0.0, %v486
      %v488 = vpop.f32.mrb[0].mxu0
      %v489 = vpop.f32.mrb[0].mxu0
      %v490 = vadd.f32 0.0, %v489
      %v491 = vpop.f32.mrb[0].mxu0
      %492 = vmatprep.mubr.bf16.mxu0 0
      %493 = vmatmul.mubr.bf16.gmra.mrb[0].mxu0 %v408
      %v494 = vpop.f32.mrb[0].mxu0
      %v495 = vadd.f32 0.0, %v494
      %v496 = vpop.f32.mrb[0].mxu0
      %v497 = vpop.f32.mrb[0].mxu0
      %v498 = vadd.f32 0.0, %v497
      %v499 = vpop.f32.mrb[0].mxu0
      %500 = vmatprep.mubr.bf16.mxu0 0
      %501 = vmatmul.mubr.bf16.gmra.mrb[0].mxu0 %v411
      %v502 = vpop.f32.mrb[0].mxu0
      %v503 = vadd.f32 0.0, %v502
      %v504 = vpop.f32.mrb[0].mxu0
      %v505 = vpop.f32.mrb[0].mxu0
      %v506 = vadd.f32 0.0, %v505
      %v507 = vpop.f32.mrb[0].mxu0
      %508 = vmatprep.mubr.bf16.mxu0 0
      %509 = vmatmul.mubr.bf16.gmra.mrb[0].mxu0 %v414
      %v510 = vpop.f32.mrb[0].mxu0
      %v511 = vadd.f32 0.0, %v510
      %v512 = vpop.f32.mrb[0].mxu0
      %v513 = vpop.f32.mrb[0].mxu0
      %v514 = vadd.f32 0.0, %v513
      %v515 = vpop.f32.mrb[0].mxu0
      %516 = vmatprep.mubr.bf16.mxu0 0
      %517 = vmatmul.mubr.bf16.gmra.mrb[0].mxu0 %v417
      %v518 = vpop.f32.mrb[0].mxu0
      %v519 = vadd.f32 0.0, %v518
      %v520 = vpop.f32.mrb[0].mxu0
      %v521 = vpop.f32.mrb[0].mxu0
      %v522 = vadd.f32 0.0, %v521
      %v523 = vpop.f32.mrb[0].mxu0
      %524 = vmatprep.mubr.bf16.mxu0 0
      %525 = vmatmul.mubr.bf16.gmra.mrb[0].mxu0 %v420
      %v526 = vpop.f32.mrb[0].mxu0
      %v527 = vadd.f32 0.0, %v526
      %v528 = vpop.f32.mrb[0].mxu0
      %v529 = vpop.f32.mrb[0].mxu0
      %v530 = vadd.f32 0.0, %v529
      %v531 = vpop.f32.mrb[0].mxu0
      %532 = vmatprep.mubr.bf16.mxu0 0
      %533 = vmatmul.mubr.bf16.gmra.mrb[0].mxu0 %v423
      %v534 = vpop.f32.mrb[0].mxu0
      %v535 = vadd.f32 0.0, %v534
      %v536 = vpop.f32.mrb[0].mxu0
      %v537 = vpop.f32.mrb[0].mxu0
      %v538 = vadd.f32 0.0, %v537
      %v539 = vpop.f32.mrb[0].mxu0
      %540 = vmatprep.mubr.bf16.mxu0 0
      %541 = vmatmul.mubr.bf16.gmra.mrb[0].mxu0 %v426
      %v542 = vpop.f32.mrb[0].mxu0
      %v543 = vadd.f32 0.0, %v542
      %v544 = vpop.f32.mrb[0].mxu0
      %v545 = vpop.f32.mrb[0].mxu0
      %v546 = vadd.f32 0.0, %v545
      %v547 = vpop.f32.mrb[0].mxu0
      %548 = vmatprep.mubr.bf16.mxu0 0
      %549 = vmatmul.mubr.bf16.gmra.mrb[0].mxu0 %v429
      %v550 = vpop.f32.mrb[0].mxu0
      %v551 = vadd.f32 0.0, %v550
      %v552 = vpop.f32.mrb[0].mxu0
      %v553 = vpop.f32.mrb[0].mxu0
      %v554 = vadd.f32 0.0, %v553
      %v555 = vpop.f32.mrb[0].mxu0
      %556 = vmatprep.mubr.bf16.mxu0 0
      %557 = vmatmul.mubr.bf16.gmra.mrb[0].mxu0 %v432
      %v558 = vpop.f32.mrb[0].mxu0
      %v559 = vadd.f32 0.0, %v558
      %v560 = vpop.f32.mrb[0].mxu0
      %v561 = vpop.f32.mrb[0].mxu0
      %v562 = vadd.f32 0.0, %v561
      %v563 = vpop.f32.mrb[0].mxu0
      %564 = vmatprep.mubr.bf16.mxu0 0
      %565 = vmatmul.mubr.bf16.gmra.mrb[0].mxu0 %v435
      %v566 = vpop.f32.mrb[0].mxu0
      %v567 = vadd.f32 0.0, %v566
      %v568 = vpop.f32.mrb[0].mxu0
      %v569 = vpop.f32.mrb[0].mxu0
      %v570 = vadd.f32 0.0, %v569
      %v571 = vpop.f32.mrb[0].mxu0
      %572 = vmatprep.mubr.bf16.mxu0 0
      %573 = vmatmul.mubr.bf16.gmra.mrb[0].mxu0 %v438
      %v574 = vpop.f32.mrb[0].mxu0
      %v575 = vadd.f32 0.0, %v574
      %v576 = vpop.f32.mrb[0].mxu0
      %v577 = vpop.f32.mrb[0].mxu0
      %v578 = vadd.f32 0.0, %v577
      %v579 = vpop.f32.mrb[0].mxu0
      %580 = vmatprep.mubr.bf16.mxu0 0
      %581 = vmatmul.mubr.bf16.gmra.mrb[0].mxu0 %v441
      %v582 = vpop.f32.mrb[0].mxu0
      %v583 = vadd.f32 0.0, %v582
      %v584 = vpop.f32.mrb[0].mxu0
      %v585 = vpop.f32.mrb[0].mxu0
      %v586 = vadd.f32 0.0, %v585
      %v587 = vpop.f32.mrb[0].mxu0
      %588 = vmatprep.mubr.bf16.mxu0 0
      %589 = vmatmul.mubr.bf16.gmra.mrb[0].mxu0 %v444
      %v590 = vpop.f32.mrb[0].mxu0
      %v591 = vadd.f32 0.0, %v590
      %v592 = vpop.f32.mrb[0].mxu0
      %v593 = vpop.f32.mrb[0].mxu0
      %v594 = vadd.f32 0.0, %v593
      %v595 = vpop.f32.mrb[0].mxu0
      %596 = vmatprep.mubr.bf16.mxu0 0
      %597 = vmatmul.mubr.bf16.gmra.mrb[0].mxu0 %v447
      %v598 = vpop.f32.mrb[0].mxu0
      %v599 = vadd.f32 0.0, %v598
      %v600 = vpop.f32.mrb[0].mxu0
      %v601 = vpop.f32.mrb[0].mxu0
      %v602 = vadd.f32 0.0, %v601
      %v603 = vpop.f32.mrb[0].mxu0
      %604 = vmatprep.mubr.bf16.mxu0 0
      %605 = vmatmul.mubr.bf16.gmra.mrb[0].mxu0 %v450
      %v606 = vpop.f32.mrb[0].mxu0
      %v607 = vadd.f32 0.0, %v606
      %v608 = vpop.f32.mrb[0].mxu0
      %v609 = vpop.f32.mrb[0].mxu0
      %v610 = vadd.f32 0.0, %v609
      %v611 = vpop.f32.mrb[0].mxu0
      %612 = vdwg.mxu0
      %v613 = vld [vmem:[%s253] sm:$0x1]
      %v615 = vlaneseq
      %v616 = vshrl.u32 %v615, 7
      %v617 = vsub.s32 0, %v616
      %v618 = vrot.slane %v613, %v617
      %v620 = vmul.f32 %v487, %v618
      %v621 = vmul.f32 %v490, %v618
      %v622 = vmul.f32 %v495, %v618
      %v623 = vmul.f32 %v498, %v618
      %v624 = vmul.f32 %v503, %v618
      %v625 = vmul.f32 %v506, %v618
      %v626 = vmul.f32 %v511, %v618
      %v627 = vmul.f32 %v514, %v618
      %v628 = vmul.f32 %v519, %v618
      %v629 = vmul.f32 %v522, %v618
      %v630 = vmul.f32 %v527, %v618
      %v631 = vmul.f32 %v530, %v618
      %v632 = vmul.f32 %v535, %v618
      %v633 = vmul.f32 %v538, %v618
      %v634 = vmul.f32 %v543, %v618
      %v635 = vmul.f32 %v546, %v618
      %v636 = vmul.f32 %v551, %v618
      %v637 = vmul.f32 %v554, %v618
      %v638 = vmul.f32 %v559, %v618
      %v639 = vmul.f32 %v562, %v618
      %v640 = vmul.f32 %v567, %v618
      %v641 = vmul.f32 %v570, %v618
      %v642 = vmul.f32 %v575, %v618
      %v643 = vmul.f32 %v578, %v618
      %v644 = vmul.f32 %v583, %v618
      %v645 = vmul.f32 %v586, %v618
      %v646 = vmul.f32 %v591, %v618
      %v647 = vmul.f32 %v594, %v618
      %v648 = vmul.f32 %v599, %v618
      %v649 = vmul.f32 %v602, %v618
      %v650 = vmul.f32 %v607, %v618
      %v651 = vmul.f32 %v610, %v618
      %v652 = vld [vmem:[%s256] sm:$0x1]
      %v654 = vlaneseq
      %v655 = vshrl.u32 %v654, 7
      %v656 = vsub.s32 0, %v655
      %v657 = vrot.slane %v652, %v656
      %v659 = vadd.f32 %v620, %v657
      %v660 = vadd.f32 %v621, %v657
      %v661 = vadd.f32 %v622, %v657
      %v662 = vadd.f32 %v623, %v657
      %v663 = vadd.f32 %v624, %v657
      %v664 = vadd.f32 %v625, %v657
      %v665 = vadd.f32 %v626, %v657
      %v666 = vadd.f32 %v627, %v657
      %v667 = vadd.f32 %v628, %v657
      %v668 = vadd.f32 %v629, %v657
      %v669 = vadd.f32 %v630, %v657
      %v670 = vadd.f32 %v631, %v657
      %v671 = vadd.f32 %v632, %v657
      %v672 = vadd.f32 %v633, %v657
      %v673 = vadd.f32 %v634, %v657
      %v674 = vadd.f32 %v635, %v657
      %v675 = vadd.f32 %v636, %v657
      %v676 = vadd.f32 %v637, %v657
      %v677 = vadd.f32 %v638, %v657
      %v678 = vadd.f32 %v639, %v657
      %v679 = vadd.f32 %v640, %v657
      %v680 = vadd.f32 %v641, %v657
      %v681 = vadd.f32 %v642, %v657
      %v682 = vadd.f32 %v643, %v657
      %v683 = vadd.f32 %v644, %v657
      %v684 = vadd.f32 %v645, %v657
      %v685 = vadd.f32 %v646, %v657
      %v686 = vadd.f32 %v647, %v657
      %v687 = vadd.f32 %v648, %v657
      %v688 = vadd.f32 %v649, %v657
      %v689 = vadd.f32 %v650, %v657
      %v690 = vadd.f32 %v651, %v657
      %v691 = vmax.f32 %v659, 0.0
      %v692 = vmax.f32 %v660, 0.0
      %v693 = vmax.f32 %v661, 0.0
      %v694 = vmax.f32 %v662, 0.0
      %v695 = vmax.f32 %v663, 0.0
      %v696 = vmax.f32 %v664, 0.0
      %v697 = vmax.f32 %v665, 0.0
      %v698 = vmax.f32 %v666, 0.0
      %v699 = vmax.f32 %v667, 0.0
      %v700 = vmax.f32 %v668, 0.0
      %v701 = vmax.f32 %v669, 0.0
      %v702 = vmax.f32 %v670, 0.0
      %v703 = vmax.f32 %v671, 0.0
      %v704 = vmax.f32 %v672, 0.0
      %v705 = vmax.f32 %v673, 0.0
      %v706 = vmax.f32 %v674, 0.0
      %v707 = vmax.f32 %v675, 0.0
      %v708 = vmax.f32 %v676, 0.0
      %v709 = vmax.f32 %v677, 0.0
      %v710 = vmax.f32 %v678, 0.0
      %v711 = vmax.f32 %v679, 0.0
      %v712 = vmax.f32 %v680, 0.0
      %v713 = vmax.f32 %v681, 0.0
      %v714 = vmax.f32 %v682, 0.0
      %v715 = vmax.f32 %v683, 0.0
      %v716 = vmax.f32 %v684, 0.0
      %v717 = vmax.f32 %v685, 0.0
      %v718 = vmax.f32 %v686, 0.0
      %v719 = vmax.f32 %v687, 0.0
      %v720 = vmax.f32 %v688, 0.0
      %v721 = vmax.f32 %v689, 0.0
      %v722 = vmax.f32 %v690, 0.0
      %v723 = vpack.c.bf16 %v692, %v691
      %v724 = vpack.c.bf16 %v694, %v693
      %v725 = vpack.c.bf16 %v696, %v695
      %v726 = vpack.c.bf16 %v698, %v697
      %v727 = vpack.c.bf16 %v700, %v699
      %v728 = vpack.c.bf16 %v702, %v701
      %v729 = vpack.c.bf16 %v704, %v703
      %v730 = vpack.c.bf16 %v706, %v705
      %v731 = vpack.c.bf16 %v708, %v707
      %v732 = vpack.c.bf16 %v710, %v709
      %v733 = vpack.c.bf16 %v712, %v711
      %v734 = vpack.c.bf16 %v714, %v713
      %v735 = vpack.c.bf16 %v716, %v715
      %v736 = vpack.c.bf16 %v718, %v717
      %v737 = vpack.c.bf16 %v720, %v719
      %v738 = vpack.c.bf16 %v722, %v721
      %v755 = vunpack.c.l.b16 %v723
      %v756 = vunpack.c.h.b16 %v723
      %v757 = vunpack.c.l.b16 %v724
      %v758 = vunpack.c.h.b16 %v724
      %v759 = vunpack.c.l.b16 %v725
      %v760 = vunpack.c.h.b16 %v725
      %v761 = vunpack.c.l.b16 %v726
      %v762 = vunpack.c.h.b16 %v726
      %v763 = vunpack.c.l.b16 %v727
      %v764 = vunpack.c.h.b16 %v727
      %v765 = vunpack.c.l.b16 %v728
      %v766 = vunpack.c.h.b16 %v728
      %v767 = vunpack.c.l.b16 %v729
      %v768 = vunpack.c.h.b16 %v729
      %v769 = vunpack.c.l.b16 %v730
      %v770 = vunpack.c.h.b16 %v730
      %v771 = vunpack.c.l.b16 %v731
      %v772 = vunpack.c.h.b16 %v731
      %v773 = vunpack.c.l.b16 %v732
      %v774 = vunpack.c.h.b16 %v732
      %v775 = vunpack.c.l.b16 %v733
      %v776 = vunpack.c.h.b16 %v733
      %v777 = vunpack.c.l.b16 %v734
      %v778 = vunpack.c.h.b16 %v734
      %v779 = vunpack.c.l.b16 %v735
      %v780 = vunpack.c.h.b16 %v735
      %v781 = vunpack.c.l.b16 %v736
      %v782 = vunpack.c.h.b16 %v736
      %v783 = vunpack.c.l.b16 %v737
      %v784 = vunpack.c.h.b16 %v737
      %v785 = vunpack.c.l.b16 %v738
      %v786 = vunpack.c.h.b16 %v738
      %v787 = vpack.c.b16 %v755, %v755
      %v788 = vpack.c.b16 %v756, %v756
      %v789 = vpack.c.b16 %v757, %v757
      %v790 = vpack.c.b16 %v758, %v758
      %v791 = vpack.c.b16 %v759, %v759
      %v792 = vpack.c.b16 %v760, %v760
      %v793 = vpack.c.b16 %v761, %v761
      %v794 = vpack.c.b16 %v762, %v762
      %v795 = vpack.c.b16 %v763, %v763
      %v796 = vpack.c.b16 %v764, %v764
      %v797 = vpack.c.b16 %v765, %v765
      %v798 = vpack.c.b16 %v766, %v766
      %v799 = vpack.c.b16 %v767, %v767
      %v800 = vpack.c.b16 %v768, %v768
      %v801 = vpack.c.b16 %v769, %v769
      %v802 = vpack.c.b16 %v770, %v770
      %v803 = vpack.c.b16 %v771, %v771
      %v804 = vpack.c.b16 %v772, %v772
      %v805 = vpack.c.b16 %v773, %v773
      %v806 = vpack.c.b16 %v774, %v774
      %v807 = vpack.c.b16 %v775, %v775
      %v808 = vpack.c.b16 %v776, %v776
      %v809 = vpack.c.b16 %v777, %v777
      %v810 = vpack.c.b16 %v778, %v778
      %v811 = vpack.c.b16 %v779, %v779
      %v812 = vpack.c.b16 %v780, %v780
      %v813 = vpack.c.b16 %v781, %v781
      %v814 = vpack.c.b16 %v782, %v782
      %v815 = vpack.c.b16 %v783, %v783
      %v816 = vpack.c.b16 %v784, %v784
      %v817 = vpack.c.b16 %v785, %v785
      %v818 = vpack.c.b16 %v786, %v786
      %vm851 = vcmask 60416
      %852 = vst.msk [vmem:[%s264] sm:$0xf] %vm851, %v787
      %853 = vst.msk [vmem:[%s264 + $0x4] sm:$0xf] %vm851, %v788
      %854 = vst.msk [vmem:[%s264 + $0x8] sm:$0xf] %vm851, %v789
      %855 = vst.msk [vmem:[%s264 + $0xc] sm:$0xf] %vm851, %v790
      %856 = vst.msk [vmem:[%s264 + $0x10] sm:$0xf] %vm851, %v791
      %857 = vst.msk [vmem:[%s264 + $0x14] sm:$0xf] %vm851, %v792
      %858 = vst.msk [vmem:[%s264 + $0x18] sm:$0xf] %vm851, %v793
      %859 = vst.msk [vmem:[%s264 + $0x1c] sm:$0xf] %vm851, %v794
      %860 = vst.msk [vmem:[%s264 + $0x20] sm:$0xf] %vm851, %v795
      %861 = vst.msk [vmem:[%s264 + $0x24] sm:$0xf] %vm851, %v796
      %862 = vst.msk [vmem:[%s264 + $0x28] sm:$0xf] %vm851, %v797
      %863 = vst.msk [vmem:[%s264 + $0x2c] sm:$0xf] %vm851, %v798
      %864 = vst.msk [vmem:[%s264 + $0x30] sm:$0xf] %vm851, %v799
      %865 = vst.msk [vmem:[%s264 + $0x34] sm:$0xf] %vm851, %v800
      %866 = vst.msk [vmem:[%s264 + $0x38] sm:$0xf] %vm851, %v801
      %867 = vst.msk [vmem:[%s264 + $0x3c] sm:$0xf] %vm851, %v802
      %868 = vst.msk [vmem:[%s264 + $0x40] sm:$0xf] %vm851, %v803
      %869 = vst.msk [vmem:[%s264 + $0x44] sm:$0xf] %vm851, %v804
      %870 = vst.msk [vmem:[%s264 + $0x48] sm:$0xf] %vm851, %v805
      %871 = vst.msk [vmem:[%s264 + $0x4c] sm:$0xf] %vm851, %v806
      %872 = vst.msk [vmem:[%s264 + $0x50] sm:$0xf] %vm851, %v807
      %873 = vst.msk [vmem:[%s264 + $0x54] sm:$0xf] %vm851, %v808
      %874 = vst.msk [vmem:[%s264 + $0x58] sm:$0xf] %vm851, %v809
      %875 = vst.msk [vmem:[%s264 + $0x5c] sm:$0xf] %vm851, %v810
      %876 = vst.msk [vmem:[%s264 + $0x60] sm:$0xf] %vm851, %v811
      %877 = vst.msk [vmem:[%s264 + $0x64] sm:$0xf] %vm851, %v812
      %878 = vst.msk [vmem:[%s264 + $0x68] sm:$0xf] %vm851, %v813
      %879 = vst.msk [vmem:[%s264 + $0x6c] sm:$0xf] %vm851, %v814
      %880 = vst.msk [vmem:[%s264 + $0x70] sm:$0xf] %vm851, %v815
      %881 = vst.msk [vmem:[%s264 + $0x74] sm:$0xf] %vm851, %v816
      %882 = vst.msk [vmem:[%s264 + $0x78] sm:$0xf] %vm851, %v817
      %883 = vst.msk [vmem:[%s264 + $0x7c] sm:$0xf] %vm851, %v818
      %s884 = smul.u32 32, %s19
      %p885 = scmp.lt.s32.totalorder %s884, 63
      %s886 = scalar_select %p885, %s884, 63
      %p887 = scmp.lt.s32.totalorder %s20, 0
      %s888 = scalar_select %p887, %s20, 0
      %s889 = sadd.s32 %s888, %s886
      %s890 = smul.addr %s889, 4
      %s891 = scalar_lea.vmem %s4, %s890
      // Predicated region
      $region37: #{bn_conv2d_forward.1} parent=35 // pred_check
        %p892 = pneg %p151
      $region38: #{bn_conv2d_forward.1} parent=35 // pred_check_branch
        %894 = sbr.rel (%p892) target = $region40
      $region39: #{bn_conv2d_forward.1} parent=35 // pred_region
        %s895 = smul.u32 32, %s19
      $region40: #{bn_conv2d_forward.1} parent=35 // pred_fallthru
        _
    $region36: #{bn_conv2d_forward.1} parent=5 // pred_fallthru
      _
    %p896 = scmp.le.s32.totalorder 2, %s10
    // Predicated region
    $region41: #{bn_conv2d_forward.1} parent=5 // pred_check
      %p897 = pneg %p896
    $region42: #{bn_conv2d_forward.1} parent=5 // pred_check_branch
      %899 = sbr.rel (%p897) target = $region44
    $region43: #{bn_conv2d_forward.1} parent=5 // pred_region
      %s900 = ssub.s32 %s10, 2
      // Predicated region
      $region45: #{bn_conv2d_forward.1} parent=43 // pred_check
        %p901 = pneg %p157
      $region46: #{bn_conv2d_forward.1} parent=43 // pred_check_branch
        %903 = sbr.rel (%p901) target = $region48
      $region47: #{bn_conv2d_forward.1} parent=43 // pred_region
        %s904 = smul.u32 32, %s21
        %p905 = scmp.lt.s32.totalorder %s904, 63
        %s906 = scalar_select %p905, %s904, 63
        %p907 = scmp.lt.s32.totalorder %s22, 0
        %s908 = scalar_select %p907, %s22, 0
        %s909 = sadd.s32 %s908, %s906
        %s910 = smul.addr %s909, 4
        %s911 = scalar_lea.vmem %s4, %s910
      $region48: #{bn_conv2d_forward.1} parent=43 // pred_fallthru
        _
    $region44: #{bn_conv2d_forward.1} parent=5 // pred_fallthru
      _
  $region6: #{bn_conv2d_forward.1} parent=0 // loop_footer
    %s14 = sadd.s32 1, %s10
  $region7: #{bn_conv2d_forward.1} parent=0 // loop_footer_branch
    %9 = sbr.rel target = $region3
  $region8: #{bn_conv2d_forward.1} parent=0 // loop_exit
    _

</llo_original>
